<compile_context>
chip_gen: v5e
topology: v5e:2x2
jax: 0.10.0
libtpu: 0.0.40
codegen_flags: <defaults>
</compile_context>

<pallas_src>
import jax
import jax.numpy as jnp
from jax import lax
from jax.experimental import pallas as pl
from jax.experimental.pallas import tpu as pltpu


def _make_tv_kernel(bp, H, W, nc_total, ragged):
    """Per-block kernel. Block view: p_ref, w_ref are (bp, H, W); out_ref is a
    (1, 8, 128) f32 slice; lanes 0..3 of sublane 0 hold
    (y_num, y_den, x_num, x_den) partial sums for this block."""

    def kernel(p_ref, w_ref, out_ref):
        # Cast in-kernel (cheap VPU op) so HBM traffic stays in the input dtype.
        p = p_ref[...].astype(jnp.float32)
        w = w_ref[...].astype(jnp.float32)

        if ragged:
            # The last grid block reads past the real planes; Pallas pads the
            # block with unspecified data.  Zero both tensors for those planes:
            # zero weights contribute nothing to numerators or denominators,
            # and zeroing p keeps any garbage NaN/Inf out of the sums.
            first = pl.program_id(0) * bp
            plane = lax.broadcasted_iota(jnp.int32, (bp, 1, 1), 0)
            valid = (first + plane) < nc_total
            p = jnp.where(valid, p, 0.0)
            w = jnp.where(valid, w, 0.0)

        # Vertical TV term: diffs stay within each plane (axis 0 untouched).
        if H >= 2:
            w_y = w[:, : H - 1, :]
            d_y = jnp.abs(p[:, 1:, :] - p[:, : H - 1, :])
            y_num = jnp.sum(d_y * w_y)
            y_den = jnp.sum(w_y)
        else:
            y_num = jnp.float32(0.0)
            y_den = jnp.float32(0.0)

        # Horizontal TV term.
        if W >= 2:
            w_x = w[:, :, : W - 1]
            d_x = jnp.abs(p[:, :, 1:] - p[:, :, : W - 1])
            x_num = jnp.sum(d_x * w_x)
            x_den = jnp.sum(w_x)
        else:
            x_num = jnp.float32(0.0)
            x_den = jnp.float32(0.0)

        # Single lane-dense write: four partial sums packed into lanes 0..3.
        sub = lax.broadcasted_iota(jnp.int32, (1, 8, 128), 1)
        lane = lax.broadcasted_iota(jnp.int32, (1, 8, 128), 2)
        on0 = sub == 0
        out_ref[...] = (
            jnp.where(on0 & (lane == 0), y_num, 0.0)
            + jnp.where(on0 & (lane == 1), y_den, 0.0)
            + jnp.where(on0 & (lane == 2), x_num, 0.0)
            + jnp.where(on0 & (lane == 3), x_den, 0.0)
        )

    return kernel


def weighted_tv_loss(pred, weight, loss_weight=1.0):
    """Pallas implementation of WeightedTVLoss.forward(pred, weight)."""
    N, C, H, W = pred.shape
    assert weight.shape == pred.shape
    NC = N * C

    # Pure metadata reshape (no HBM copy): planes along the leading axis.
    p = pred.reshape(NC, H, W)
    w = weight.reshape(NC, H, W)

    itemsize = max(pred.dtype.itemsize, weight.dtype.itemsize)
    plane_elems = H * W

    # --- block sizing --------------------------------------------------------
    # Whole planes per grid step.  Sized so that (2 inputs x 2 pipeline
    # buffers) of the native-dtype tile plus a conservative count of in-kernel
    # f32 temporaries stay well inside scoped VMEM on every generation (v7x
    # has only 64 MiB physical), while each step still moves a few MiB of HBM
    # so the ~0.35 us per-step grid overhead stays small.
    compute_budget = 40 << 20                                 # VMEM bytes planned for
    per_plane_cost = plane_elems * (4 * itemsize + 10 * 4)    # pipelining + f32 temps
    bp = max(1, compute_budget // per_plane_cost)
    # Never need more than ~4 MiB of input per step.
    bp = min(bp, max(1, (4 << 20) // max(1, plane_elems * itemsize)))
    bp = min(bp, NC)
    # Keep at least two blocks so v7x's two TensorCores both get work.
    if NC >= 2:
        bp = min(bp, (NC + 1) // 2)
    num_blocks = (NC + bp - 1) // bp
    ragged = num_blocks * bp != NC

    kernel = _make_tv_kernel(bp, H, W, NC, ragged)

    vmem_limit = int(min(48 << 20, max(32 << 20, bp * per_plane_cost + (4 << 20))))

    partials = pl.pallas_call(
        kernel,
        out_shape=jax.ShapeDtypeStruct((num_blocks, 8, 128), jnp.float32),
        grid=(num_blocks,),
        in_specs=[
            pl.BlockSpec((bp, H, W), lambda i: (i, 0, 0)),
            pl.BlockSpec((bp, H, W), lambda i: (i, 0, 0)),
        ],
        out_specs=pl.BlockSpec((1, 8, 128), lambda i: (i, 0, 0)),
        compiler_params=pltpu.CompilerParams(
            # Each block writes its own partial-sum slice -> genuinely parallel
            # grid axis (lets v7x shard blocks across both TensorCores).
            dimension_semantics=("parallel",),
            vmem_limit_bytes=vmem_limit,
        ),
    )(p, w)

    # Tiny epilogue in plain JAX: sum per-block partials, then divide.
    sums = jnp.sum(partials, axis=0)          # (8, 128)
    y_num, y_den = sums[0, 0], sums[0, 1]
    x_num, x_den = sums[0, 2], sums[0, 3]

    y_diff = loss_weight * (y_num / y_den)
    x_diff = loss_weight * (x_num / x_den)
    return x_diff + y_diff


def _reference_tv_loss(pred, weight, loss_weight=1.0):
    """Pure-JAX reference mirroring the PyTorch module exactly."""
    pred = pred.astype(jnp.float32)
    weight = weight.astype(jnp.float32)
    y_num = jnp.sum(jnp.abs(pred[:, :, :-1, :] - pred[:, :, 1:, :]) * weight[:, :, :-1, :])
    y_den = jnp.sum(weight[:, :, :-1, :])
    x_num = jnp.sum(jnp.abs(pred[:, :, :, :-1] - pred[:, :, :, 1:]) * weight[:, :, :, :-1])
    x_den = jnp.sum(weight[:, :, :, :-1])
    return loss_weight * (y_num / y_den) + loss_weight * (x_num / x_den)


if __name__ == "__main__":
    # WeightedTVLoss has no learned parameters, only loss_weight (default 1.0).
    loss_weight = 1.0
    key = jax.random.PRNGKey(0)

    # (N, C, H, W) test shapes:
    #  - (2, 4, 16, 16): canonical small config (2 blocks, even plane split).
    #  - (1, 3, 16, 16): odd plane count -> exercises the ragged-tail masking.
    #  - (2, 2, 24, 128): lane-dense W = 128 layout.
    for shape in [(2, 4, 16, 16), (1, 3, 16, 16), (2, 2, 24, 128)]:
        key, k_pred, k_w = jax.random.split(key, 3)
        pred = jax.random.normal(k_pred, shape, dtype=jnp.float32)
        # Positive element-wise weights (as a weight map would be in practice).
        weight = jax.random.uniform(k_w, shape, dtype=jnp.float32,
                                    minval=0.1, maxval=1.0)

        loss = jax.block_until_ready(weighted_tv_loss(pred, weight, loss_weight))
        ref = jax.block_until_ready(_reference_tv_loss(pred, weight, loss_weight))
        assert jnp.allclose(loss, ref, rtol=1e-5, atol=1e-6), (shape, loss, ref)

    print("KERNEL_OK")
</pallas_src>

<mosaic_0001>
module attributes {stable_mosaic.version = 11 : i64} {
  func.func @kernel(%arg0: i32, %arg1: memref<4x16x16xf32, #tpu.memory_space<vmem>>, %arg2: memref<4x16x16xf32, #tpu.memory_space<vmem>>, %arg3: memref<1x8x128xf32, #tpu.memory_space<vmem>>) attributes {dimension_semantics = [#tpu.dimension_semantics<parallel>], iteration_bounds = array<i64: 2>, scalar_prefetch = 0 : i64, scratch_operands = 0 : i64, tpu.core_type = #tpu.core_type<tc>, window_params = [{transform_indices = @transform_0, window_bounds = array<i64: 4, 16, 16>}, {transform_indices = @transform_1, window_bounds = array<i64: 4, 16, 16>}, {transform_indices = @transform_2, window_bounds = array<i64: 1, 8, 128>}]} {
    %c0 = arith.constant 0 : index
    %c0_0 = arith.constant 0 : index
    %c0_1 = arith.constant 0 : index
    %0 = vector.load %arg1[%c0, %c0_0, %c0_1] : memref<4x16x16xf32, #tpu.memory_space<vmem>>, vector<4x16x16xf32>
    %c0_2 = arith.constant 0 : index
    %c0_3 = arith.constant 0 : index
    %c0_4 = arith.constant 0 : index
    %1 = vector.load %arg2[%c0_2, %c0_3, %c0_4] : memref<4x16x16xf32, #tpu.memory_space<vmem>>, vector<4x16x16xf32>
    %2 = vector.extract_strided_slice %1 {offsets = [0, 0, 0], sizes = [4, 15, 16], strides = [1, 1, 1]} : vector<4x16x16xf32> to vector<4x15x16xf32>
    %3 = vector.extract_strided_slice %0 {offsets = [0, 1, 0], sizes = [4, 15, 16], strides = [1, 1, 1]} : vector<4x16x16xf32> to vector<4x15x16xf32>
    %4 = vector.extract_strided_slice %0 {offsets = [0, 0, 0], sizes = [4, 15, 16], strides = [1, 1, 1]} : vector<4x16x16xf32> to vector<4x15x16xf32>
    %5 = arith.subf %3, %4 : vector<4x15x16xf32>
    %6 = math.absf %5 : vector<4x15x16xf32>
    %7 = arith.mulf %6, %2 : vector<4x15x16xf32>
    %8 = vector.shape_cast %7 : vector<4x15x16xf32> to vector<1x4x15x16xf32>
    %cst = arith.constant dense<0.000000e+00> : vector<1xf32>
    %9 = vector.multi_reduction <add>, %8, %cst [1, 2, 3] : vector<1x4x15x16xf32> to vector<1xf32>
    %10 = vector.shape_cast %9 : vector<1xf32> to vector<1x1x1x1xf32>
    %11 = vector.extract %10[0, 0, 0, 0] : f32 from vector<1x1x1x1xf32>
    %12 = vector.shape_cast %2 : vector<4x15x16xf32> to vector<1x4x15x16xf32>
    %cst_5 = arith.constant dense<0.000000e+00> : vector<1xf32>
    %13 = vector.multi_reduction <add>, %12, %cst_5 [1, 2, 3] : vector<1x4x15x16xf32> to vector<1xf32>
    %14 = vector.shape_cast %13 : vector<1xf32> to vector<1x1x1x1xf32>
    %15 = vector.extract %14[0, 0, 0, 0] : f32 from vector<1x1x1x1xf32>
    %16 = vector.extract_strided_slice %1 {offsets = [0, 0, 0], sizes = [4, 16, 15], strides = [1, 1, 1]} : vector<4x16x16xf32> to vector<4x16x15xf32>
    %17 = vector.extract_strided_slice %0 {offsets = [0, 0, 1], sizes = [4, 16, 15], strides = [1, 1, 1]} : vector<4x16x16xf32> to vector<4x16x15xf32>
    %18 = vector.extract_strided_slice %0 {offsets = [0, 0, 0], sizes = [4, 16, 15], strides = [1, 1, 1]} : vector<4x16x16xf32> to vector<4x16x15xf32>
    %19 = arith.subf %17, %18 : vector<4x16x15xf32>
    %20 = math.absf %19 : vector<4x16x15xf32>
    %21 = arith.mulf %20, %16 : vector<4x16x15xf32>
    %22 = vector.shape_cast %21 : vector<4x16x15xf32> to vector<1x4x16x15xf32>
    %cst_6 = arith.constant dense<0.000000e+00> : vector<1xf32>
    %23 = vector.multi_reduction <add>, %22, %cst_6 [1, 2, 3] : vector<1x4x16x15xf32> to vector<1xf32>
    %24 = vector.shape_cast %23 : vector<1xf32> to vector<1x1x1x1xf32>
    %25 = vector.extract %24[0, 0, 0, 0] : f32 from vector<1x1x1x1xf32>
    %26 = vector.shape_cast %16 : vector<4x16x15xf32> to vector<1x4x16x15xf32>
    %cst_7 = arith.constant dense<0.000000e+00> : vector<1xf32>
    %27 = vector.multi_reduction <add>, %26, %cst_7 [1, 2, 3] : vector<1x4x16x15xf32> to vector<1xf32>
    %28 = vector.shape_cast %27 : vector<1xf32> to vector<1x1x1x1xf32>
    %29 = vector.extract %28[0, 0, 0, 0] : f32 from vector<1x1x1x1xf32>
    %30 = tpu.iota {dimensions = array<i32: 1>} : vector<1x8x128xi32>
    %31 = tpu.iota {dimensions = array<i32: 2>} : vector<1x8x128xi32>
    %c0_i32 = arith.constant 0 : i32
    %32 = vector.broadcast %c0_i32 : i32 to vector<1x8x128xi32>
    %33 = arith.cmpi eq, %30, %32 : vector<1x8x128xi32>
    %c0_i32_8 = arith.constant 0 : i32
    %34 = vector.broadcast %c0_i32_8 : i32 to vector<1x8x128xi32>
    %35 = arith.cmpi eq, %31, %34 : vector<1x8x128xi32>
    %36 = arith.andi %33, %35 : vector<1x8x128xi1>
    %cst_9 = arith.constant 0.000000e+00 : f32
    %37 = vector.broadcast %11 : f32 to vector<1x8x128xf32>
    %38 = vector.broadcast %cst_9 : f32 to vector<1x8x128xf32>
    %39 = arith.select %36, %37, %38 : vector<1x8x128xi1>, vector<1x8x128xf32>
    %c1_i32 = arith.constant 1 : i32
    %40 = vector.broadcast %c1_i32 : i32 to vector<1x8x128xi32>
    %41 = arith.cmpi eq, %31, %40 : vector<1x8x128xi32>
    %42 = arith.andi %33, %41 : vector<1x8x128xi1>
    %cst_10 = arith.constant 0.000000e+00 : f32
    %43 = vector.broadcast %15 : f32 to vector<1x8x128xf32>
    %44 = vector.broadcast %cst_10 : f32 to vector<1x8x128xf32>
    %45 = arith.select %42, %43, %44 : vector<1x8x128xi1>, vector<1x8x128xf32>
    %46 = arith.addf %39, %45 : vector<1x8x128xf32>
    %c2_i32 = arith.constant 2 : i32
    %47 = vector.broadcast %c2_i32 : i32 to vector<1x8x128xi32>
    %48 = arith.cmpi eq, %31, %47 : vector<1x8x128xi32>
    %49 = arith.andi %33, %48 : vector<1x8x128xi1>
    %cst_11 = arith.constant 0.000000e+00 : f32
    %50 = vector.broadcast %25 : f32 to vector<1x8x128xf32>
    %51 = vector.broadcast %cst_11 : f32 to vector<1x8x128xf32>
    %52 = arith.select %49, %50, %51 : vector<1x8x128xi1>, vector<1x8x128xf32>
    %53 = arith.addf %46, %52 : vector<1x8x128xf32>
    %c3_i32 = arith.constant 3 : i32
    %54 = vector.broadcast %c3_i32 : i32 to vector<1x8x128xi32>
    %55 = arith.cmpi eq, %31, %54 : vector<1x8x128xi32>
    %56 = arith.andi %33, %55 : vector<1x8x128xi1>
    %cst_12 = arith.constant 0.000000e+00 : f32
    %57 = vector.broadcast %29 : f32 to vector<1x8x128xf32>
    %58 = vector.broadcast %cst_12 : f32 to vector<1x8x128xf32>
    %59 = arith.select %56, %57, %58 : vector<1x8x128xi1>, vector<1x8x128xf32>
    %60 = arith.addf %53, %59 : vector<1x8x128xf32>
    %c0_13 = arith.constant 0 : index
    %c0_14 = arith.constant 0 : index
    %c0_15 = arith.constant 0 : index
    %61 = vector.load %arg3[%c0_13, %c0_14, %c0_15] : memref<1x8x128xf32, #tpu.memory_space<vmem>>, vector<1x8x128xf32>
    tpu.vector_store %arg3[%c0_13, %c0_14, %c0_15], %60 {strides = array<i32>} : memref<1x8x128xf32, #tpu.memory_space<vmem>>, vector<1x8x128xf32>,
    return
  }
  func.func @transform_0(%arg0: i32) -> (i32, i32, i32) {
    %c0_i32 = arith.constant 0 : i32
    %c0_i32_0 = arith.constant 0 : i32
    %c0_i32_1 = arith.constant 0 : i32
    return %arg0, %c0_i32, %c0_i32_0 : i32, i32, i32
  }
  func.func @transform_1(%arg0: i32) -> (i32, i32, i32) {
    %c0_i32 = arith.constant 0 : i32
    %c0_i32_0 = arith.constant 0 : i32
    %c0_i32_1 = arith.constant 0 : i32
    return %arg0, %c0_i32, %c0_i32_0 : i32, i32, i32
  }
  func.func @transform_2(%arg0: i32) -> (i32, i32, i32) {
    %c0_i32 = arith.constant 0 : i32
    %c0_i32_0 = arith.constant 0 : i32
    %c0_i32_1 = arith.constant 0 : i32
    return %arg0, %c0_i32, %c0_i32_0 : i32, i32, i32
  }
}

</mosaic_0001>

<llo_original>
// kernel: tpu_custom_call.1
$region0: #{tpu_custom_call.1}
  #allocation0 [shape = 'u32[]', space=smem, size = 0x4, offset = 0x4, fixed_abs, tag = 'smem constant byte address 0x4 - core index']
  #allocation1 [shape = 'u32[72,128]{1,0:T(1,128)}', space=vmem, size = 0x9000, scoped, tag = 'internal scratch']
  %s0 = inlined_call_operand.hbm [shape: f32[8,16,16], index: 0, kind: input, shape index: {}]
  %s1 = inlined_call_operand.hbm [shape: f32[8,16,16], index: 1, kind: input, shape index: {}]
  %s2 = inlined_call_operand.hbm [shape: f32[2,8,128], index: 2, kind: output, shape index: {}]
  %s3 = sld [smem:[#allocation0]]
  $region49: #{tpu_custom_call.1} parent=0
    _
  %s5 = ssub.s32 1, %s3
  %s6 = scalar_select 0, %s5, %s3
  $region1: #{tpu_custom_call.1} parent=0
    #allocation2 [shape = 'u8[65536]{0}', space=vmem, size = 0x10000, scoped, tag = 'input window, operand 0']
    #allocation3 [shape = 's32[2]{0}', space=sflag, size = 0x8, scoped, tag = 'scoped memory for tpu_custom_call.1']
    #allocation4 [shape = 's32[2]{0}', space=sflag, size = 0x8, scoped, tag = 'scoped memory for tpu_custom_call.1']
    #allocation5 [shape = 'u8[65536]{0}', space=vmem, size = 0x10000, scoped, tag = 'input window, operand 1']
    #allocation6 [shape = 's32[2]{0}', space=sflag, size = 0x8, scoped, tag = 'scoped memory for tpu_custom_call.1']
    #allocation7 [shape = 'u8[8192]{0}', space=vmem, size = 0x2000, scoped, tag = 'output window, operand 0']
    %7 = vsyncpa [#allocation3], 0
    %s8 = scalar_lea.sflag [#allocation3], 1
    %9 = vsyncpa %s8, 0
    %10 = vsyncpa [#allocation6], 0
    %s11 = scalar_lea.sflag [#allocation6], 1
    %12 = vsyncpa %s11, 0
    %13 = vsyncpa [#allocation4], 0
    %s14 = scalar_lea.sflag [#allocation4], 1
    %15 = vsyncpa %s14, 0
    loop: start=0, step=1, limit=4
    $region2: #{tpu_custom_call.1} parent=1 // loop_pre_header
      _
    $region3: #{tpu_custom_call.1} parent=1 // loop_header
      %s17 = sphi 0, %s21
      %p18 = scmp.ge.s32.totalorder %s17, 4
      %s27 = sphi 0, %s29
      %s30 = sphi 0, %s27
      %s31 = sphi 0, %s30
      %s47 = sphi 0, %s31
      %s53 = sphi 0, %s55
      %s56 = sphi 0, %s53
      %s57 = sphi 0, %s56
      %s73 = sphi 0, %s57
      %s79 = sphi 0, %s81
      %s82 = sphi 0, %s79
      %s83 = sphi 0, %s82
      %s99 = sphi 0, %s83
    $region4: #{tpu_custom_call.1} parent=1 // loop_header_branch
      %20 = sbr.rel (%p18) target = $region8
    $region5: #{tpu_custom_call.1} parent=1 // loop_body
      %s22 = ssub.s32 %s17, 1
      %s23 = ssub.s32 %s17, 2
      %s24 = sadd.s32 %s17, 1
      %s25 = ssub.s32 %s17, %s24
      %p26 = scmp.eq.s32.totalorder %s25, 0
      %s28 = sadd.s32 %s27, 1
      %s29 = scalar_select %p26, %s27, %s28
      %p32 = pneg %p26
      %p33 = scmp.eq.s32.totalorder %s17, 1
      %p34 = por %p32, %p33
      %p35 = scmp.ne.s32.totalorder %s27, %s30
      %p36 = scmp.eq.s32.totalorder %s17, 0
      %p37 = por %p35, %p36
      %p38 = scmp.ne.s32.totalorder %s27, %s30
      %p39 = scmp.eq.s32.totalorder %s22, 1
      %p40 = por %p38, %p39
      %p41 = scmp.ne.s32.totalorder %s30, %s31
      %p42 = scmp.eq.s32.totalorder %s22, 0
      %p43 = por %p41, %p42
      %p44 = scmp.ne.s32.totalorder %s30, %s31
      %p45 = scmp.eq.s32.totalorder %s23, 1
      %p46 = por %p44, %p45
      %p48 = scmp.ne.s32.totalorder %s31, %s47
      %p49 = scmp.eq.s32.totalorder %s23, 0
      %p50 = por %p48, %p49
      %s51 = ssub.s32 %s17, %s24
      %p52 = scmp.eq.s32.totalorder %s51, 0
      %s54 = sadd.s32 %s53, 1
      %s55 = scalar_select %p52, %s53, %s54
      %p58 = pneg %p52
      %p59 = scmp.eq.s32.totalorder %s17, 1
      %p60 = por %p58, %p59
      %p61 = scmp.ne.s32.totalorder %s53, %s56
      %p62 = scmp.eq.s32.totalorder %s17, 0
      %p63 = por %p61, %p62
      %p64 = scmp.ne.s32.totalorder %s53, %s56
      %p65 = scmp.eq.s32.totalorder %s22, 1
      %p66 = por %p64, %p65
      %p67 = scmp.ne.s32.totalorder %s56, %s57
      %p68 = scmp.eq.s32.totalorder %s22, 0
      %p69 = por %p67, %p68
      %p70 = scmp.ne.s32.totalorder %s56, %s57
      %p71 = scmp.eq.s32.totalorder %s23, 1
      %p72 = por %p70, %p71
      %p74 = scmp.ne.s32.totalorder %s57, %s73
      %p75 = scmp.eq.s32.totalorder %s23, 0
      %p76 = por %p74, %p75
      %s77 = ssub.s32 %s17, %s24
      %p78 = scmp.eq.s32.totalorder %s77, 0
      %s80 = sadd.s32 %s79, 1
      %s81 = scalar_select %p78, %s79, %s80
      %p84 = pneg %p78
      %p85 = scmp.eq.s32.totalorder %s17, 1
      %p86 = por %p84, %p85
      %p87 = scmp.ne.s32.totalorder %s79, %s82
      %p88 = scmp.eq.s32.totalorder %s17, 0
      %p89 = por %p87, %p88
      %p90 = scmp.ne.s32.totalorder %s79, %s82
      %p91 = scmp.eq.s32.totalorder %s22, 1
      %p92 = por %p90, %p91
      %p93 = scmp.ne.s32.totalorder %s82, %s83
      %p94 = scmp.eq.s32.totalorder %s22, 0
      %p95 = por %p93, %p94
      %p96 = scmp.ne.s32.totalorder %s82, %s83
      %p97 = scmp.eq.s32.totalorder %s23, 1
      %p98 = por %p96, %p97
      %p100 = scmp.ne.s32.totalorder %s83, %s99
      %p101 = scmp.eq.s32.totalorder %s23, 0
      %p102 = por %p100, %p101
      %p103 = scmp.le.s32.totalorder 1, %s17
      %p104 = scmp.lt.s32.totalorder %s17, 3
      %p105 = pnand %p103, %p104
      %p106 = pneg %p105
      // Predicated region
      $region9: #{tpu_custom_call.1} parent=5 // pred_check
        _
      $region10: #{tpu_custom_call.1} parent=5 // pred_check_branch
        %108 = sbr.rel (%p105) target = $region12
      $region11: #{tpu_custom_call.1} parent=5 // pred_region
        %s109 = ssub.s32 %s17, 1
      $region12: #{tpu_custom_call.1} parent=5 // pred_fallthru
        _
      %p110 = scmp.lt.s32.totalorder %s17, 2
      // Predicated region
      $region13: #{tpu_custom_call.1} parent=5 // pred_check
        %p111 = pneg %p110
      $region14: #{tpu_custom_call.1} parent=5 // pred_check_branch
        %113 = sbr.rel (%p111) target = $region16
      $region15: #{tpu_custom_call.1} parent=5 // pred_region
        // Predicated region
        $region17: #{tpu_custom_call.1} parent=15 // pred_check
          %p114 = pneg %p37
        $region18: #{tpu_custom_call.1} parent=15 // pred_check_branch
          %116 = sbr.rel (%p114) target = $region20
        $region19: #{tpu_custom_call.1} parent=15 // pred_region
          %s117 = sand.u32 %s27, 1
          %s118 = scalar_lea.sflag [#allocation3], %s117
          %s119 = sand.u32 %s27, 1
          %s120 = smul.addr %s119, 64
          %s121 = scalar_lea.vmem [#allocation2], %s120
          %s122 = smul.u32 4, %s17
          %124 = vsyncadd %s118, 0
          %s125 = smul.addr %s122, 2
          %s126 = smul.addr %s125, 8
          %s127 = scalar_lea.hbm %s0, %s126
          %s128 = sshll.u32 %s127, 4
          %s129 = int_to_ptr.hbm [resolvable:$true] %s128
          %s130 = sshll.u32 %s121, 4
          %s131 = int_to_ptr.vmem [resolvable:$true] %s130
          %136 = dma.hbm_to_vmem [thread:$0]  %s129, 1024, %s131, %s118, 128, 128, 8
        $region20: #{tpu_custom_call.1} parent=15 // pred_fallthru
          _
        // Predicated region
        $region21: #{tpu_custom_call.1} parent=15 // pred_check
          %p137 = pneg %p63
        $region22: #{tpu_custom_call.1} parent=15 // pred_check_branch
          %139 = sbr.rel (%p137) target = $region24
        $region23: #{tpu_custom_call.1} parent=15 // pred_region
          %s140 = sand.u32 %s53, 1
          %s141 = scalar_lea.sflag [#allocation6], %s140
          %s142 = sand.u32 %s53, 1
          %s143 = smul.addr %s142, 64
          %s144 = scalar_lea.vmem [#allocation5], %s143
          %s145 = smul.u32 4, %s17
          %147 = vsyncadd %s141, 0
          %s148 = smul.addr %s145, 2
          %s149 = smul.addr %s148, 8
          %s150 = scalar_lea.hbm %s1, %s149
          %s151 = sshll.u32 %s150, 4
          %s152 = int_to_ptr.hbm [resolvable:$true] %s151
          %s153 = sshll.u32 %s144, 4
          %s154 = int_to_ptr.vmem [resolvable:$true] %s153
          %159 = dma.hbm_to_vmem [thread:$0]  %s152, 1024, %s154, %s141, 128, 128, 8
        $region24: #{tpu_custom_call.1} parent=15 // pred_fallthru
          _
      $region16: #{tpu_custom_call.1} parent=5 // pred_fallthru
        _
      %p160 = scmp.le.s32.totalorder 1, %s17
      %p161 = scmp.lt.s32.totalorder %s17, 3
      %p162 = pnand %p160, %p161
      %p163 = pneg %p162
      // Predicated region
      $region25: #{tpu_custom_call.1} parent=5 // pred_check
        _
      $region26: #{tpu_custom_call.1} parent=5 // pred_check_branch
        %165 = sbr.rel (%p162) target = $region28
      $region27: #{tpu_custom_call.1} parent=5 // pred_region
        %s166 = ssub.s32 %s17, 1
        %s167 = sand.u32 %s30, 1
        %s168 = scalar_lea.sflag [#allocation3], %s167
        %s169 = sand.u32 %s30, 1
        %s170 = smul.addr %s169, 64
        %s171 = scalar_lea.vmem [#allocation2], %s170
        // Predicated region
        $region29: #{tpu_custom_call.1} parent=27 // pred_check
          %p172 = pneg %p43
        $region30: #{tpu_custom_call.1} parent=27 // pred_check_branch
          %174 = sbr.rel (%p172) target = $region32
        $region31: #{tpu_custom_call.1} parent=27 // pred_region
          %176 = dma.done %s168, 1024
        $region32: #{tpu_custom_call.1} parent=27 // pred_fallthru
          _
        %s177 = sand.u32 %s56, 1
        %s178 = scalar_lea.sflag [#allocation6], %s177
        %s179 = sand.u32 %s56, 1
        %s180 = smul.addr %s179, 64
        %s181 = scalar_lea.vmem [#allocation5], %s180
        // Predicated region
        $region33: #{tpu_custom_call.1} parent=27 // pred_check
          %p182 = pneg %p69
        $region34: #{tpu_custom_call.1} parent=27 // pred_check_branch
          %184 = sbr.rel (%p182) target = $region36
        $region35: #{tpu_custom_call.1} parent=27 // pred_region
          %186 = dma.done %s178, 1024
        $region36: #{tpu_custom_call.1} parent=27 // pred_fallthru
          _
        %s187 = sand.u32 %s30, 1
        %s188 = scalar_lea.sflag [#allocation3], %s187
        %s189 = sand.u32 %s30, 1
        %s190 = smul.addr %s189, 64
        %s191 = scalar_lea.vmem [#allocation2], %s190
        %p192 = pneg %p43
        %p193 = pneg %p40
        %s194 = sand.u32 %s56, 1
        %s195 = scalar_lea.sflag [#allocation6], %s194
        %s196 = sand.u32 %s56, 1
        %s197 = smul.addr %s196, 64
        %s198 = scalar_lea.vmem [#allocation5], %s197
        %p199 = pneg %p69
        %p200 = pneg %p66
        %p201 = pneg %p95
        %p202 = pneg %p92
        %s203 = sand.u32 %s82, 1
        %s204 = scalar_lea.sflag [#allocation4], %s203
        %s205 = sand.u32 %s82, 1
        %s206 = smul.addr %s205, 8
        %s207 = scalar_lea.vmem [#allocation7], %s206
        %s208 = smul.u32 4, %s22
        %s209 = smul.u32 4, %s22
        %v210 = vld [vmem:[%s171] sm:$0xff]
        %v211 = vld [vmem:[%s171 + $0x8] sm:$0xff]
        %v212 = vld [vmem:[%s171 + $0x10] sm:$0xff]
        %v213 = vld [vmem:[%s171 + $0x18] sm:$0xff]
        %v214 = vld [vmem:[%s171 + $0x20] sm:$0xff]
        %v215 = vld [vmem:[%s171 + $0x28] sm:$0xff]
        %v216 = vld [vmem:[%s171 + $0x30] sm:$0xff]
        %v217 = vld [vmem:[%s171 + $0x38] sm:$0xff]
        %v218 = vld [vmem:[%s181] sm:$0xff]
        %v219 = vld [vmem:[%s181 + $0x8] sm:$0xff]
        %v220 = vld [vmem:[%s181 + $0x10] sm:$0xff]
        %v221 = vld [vmem:[%s181 + $0x18] sm:$0xff]
        %v222 = vld [vmem:[%s181 + $0x20] sm:$0xff]
        %v223 = vld [vmem:[%s181 + $0x28] sm:$0xff]
        %v224 = vld [vmem:[%s181 + $0x30] sm:$0xff]
        %v225 = vld [vmem:[%s181 + $0x38] sm:$0xff]
        %vm234 = vcmask 1040384
        %v235 = vrot.slane %v210, 7
        %v236 = vrot.slane %v211, 7
        %v237 = vsel %vm234, %v235, %v236
        %v238 = vrot.slane %v212, 7
        %v239 = vrot.slane %v213, 7
        %v240 = vsel %vm234, %v238, %v239
        %v241 = vrot.slane %v214, 7
        %v242 = vrot.slane %v215, 7
        %v243 = vsel %vm234, %v241, %v242
        %v244 = vrot.slane %v216, 7
        %v245 = vrot.slane %v217, 7
        %v246 = vsel %vm234, %v244, %v245
        %v255 = vsub.f32 %v210, %v235
        %v256 = vsub.f32 %v211, %v237
        %v257 = vsub.f32 %v212, %v238
        %v258 = vsub.f32 %v213, %v240
        %v259 = vsub.f32 %v214, %v241
        %v260 = vsub.f32 %v215, %v243
        %v261 = vsub.f32 %v216, %v244
        %v262 = vsub.f32 %v217, %v246
        %v263 = vand.u32 2147483647, %v255
        %v264 = vand.u32 2147483647, %v256
        %v265 = vand.u32 2147483647, %v257
        %v266 = vand.u32 2147483647, %v258
        %v267 = vand.u32 2147483647, %v259
        %v268 = vand.u32 2147483647, %v260
        %v269 = vand.u32 2147483647, %v261
        %v270 = vand.u32 2147483647, %v262
        %v279 = vrot.slane %v218, 7
        %v280 = vrot.slane %v219, 7
        %v281 = vsel %vm234, %v279, %v280
        %v282 = vrot.slane %v220, 7
        %v283 = vrot.slane %v221, 7
        %v284 = vsel %vm234, %v282, %v283
        %v285 = vrot.slane %v222, 7
        %v286 = vrot.slane %v223, 7
        %v287 = vsel %vm234, %v285, %v286
        %v288 = vrot.slane %v224, 7
        %v289 = vrot.slane %v225, 7
        %v290 = vsel %vm234, %v288, %v289
        %v299 = vmul.f32 %v263, %v279
        %v300 = vmul.f32 %v264, %v281
        %v301 = vmul.f32 %v265, %v282
        %v302 = vmul.f32 %v266, %v284
        %v303 = vmul.f32 %v267, %v285
        %v304 = vmul.f32 %v268, %v287
        %v305 = vmul.f32 %v269, %v288
        %v306 = vmul.f32 %v270, %v290
        %vm315 = vcmask 1046528
        %v316 = vrot.slane %v299, 1
        %v317 = vrot.slane %v300, 1
        %v318 = vsel %vm315, %v316, %v317
        %v319 = vrot.slane %v301, 1
        %v320 = vrot.slane %v302, 1
        %v321 = vsel %vm315, %v319, %v320
        %v322 = vrot.slane %v303, 1
        %v323 = vrot.slane %v304, 1
        %v324 = vsel %vm315, %v322, %v323
        %v325 = vrot.slane %v305, 1
        %v326 = vrot.slane %v306, 1
        %v327 = vsel %vm315, %v325, %v326
        %vm336 = vcmask 130048
        %v337 = vsel %vm336, %v318, 0.0
        %vm338 = vcmask 129024
        %v339 = vsel %vm338, %v317, 0.0
        %v340 = vadd.f32 %v337, %v339
        %v341 = vsel %vm336, %v321, 0.0
        %v342 = vadd.f32 %v340, %v341
        %v343 = vsel %vm338, %v320, 0.0
        %v344 = vadd.f32 %v342, %v343
        %v345 = vsel %vm336, %v324, 0.0
        %v346 = vadd.f32 %v344, %v345
        %v347 = vsel %vm338, %v323, 0.0
        %v348 = vadd.f32 %v346, %v347
        %v349 = vsel %vm336, %v327, 0.0
        %v350 = vadd.f32 %v348, %v349
        %v351 = vsel %vm338, %v326, 0.0
        %v352 = vadd.f32 %v350, %v351
        %353 = vadd.xlane.f32.xlu0 %v352
        %v354 = vpop.xlane.xlu0 %353
        %v355 = vrot.slane %v354, 4
        %v356 = vadd.f32 %v354, %v355
        %v357 = vrot.slane %v356, 2
        %v358 = vadd.f32 %v356, %v357
        %v359 = vrot.slane %v358, 1
        %v360 = vadd.f32 %v358, %v359
        %s361 = vtos %v360
        %v362 = vsel %vm336, %v218, 0.0
        %v363 = vsel %vm338, %v219, 0.0
        %v364 = vadd.f32 %v362, %v363
        %v365 = vsel %vm336, %v220, 0.0
        %v366 = vadd.f32 %v364, %v365
        %v367 = vsel %vm338, %v221, 0.0
        %v368 = vadd.f32 %v366, %v367
        %v369 = vsel %vm336, %v222, 0.0
        %v370 = vadd.f32 %v368, %v369
        %v371 = vsel %vm338, %v223, 0.0
        %v372 = vadd.f32 %v370, %v371
        %v373 = vsel %vm336, %v224, 0.0
        %v374 = vadd.f32 %v372, %v373
        %v375 = vsel %vm338, %v225, 0.0
        %v376 = vadd.f32 %v374, %v375
        %377 = vadd.xlane.f32.xlu0 %v376
        %v378 = vpop.xlane.xlu0 %377
        %v379 = vrot.slane %v378, 4
        %v380 = vadd.f32 %v378, %v379
        %v381 = vrot.slane %v380, 2
        %v382 = vadd.f32 %v380, %v381
        %v383 = vrot.slane %v382, 1
        %v384 = vadd.f32 %v382, %v383
        %s385 = vtos %v384
        %386 = vrot.lane.b32.xlu0 %v210, 1
        %v387 = vpop.permute.xlu0 %386
        %388 = vrot.lane.b32.xlu0 %v211, 1
        %v389 = vpop.permute.xlu0 %388
        %390 = vrot.lane.b32.xlu0 %v212, 1
        %v391 = vpop.permute.xlu0 %390
        %392 = vrot.lane.b32.xlu0 %v213, 1
        %v393 = vpop.permute.xlu0 %392
        %394 = vrot.lane.b32.xlu0 %v214, 1
        %v395 = vpop.permute.xlu0 %394
        %396 = vrot.lane.b32.xlu0 %v215, 1
        %v397 = vpop.permute.xlu0 %396
        %398 = vrot.lane.b32.xlu0 %v216, 1
        %v399 = vpop.permute.xlu0 %398
        %400 = vrot.lane.b32.xlu0 %v217, 1
        %v401 = vpop.permute.xlu0 %400
        %v410 = vsub.f32 %v210, %v387
        %v411 = vsub.f32 %v211, %v389
        %v412 = vsub.f32 %v212, %v391
        %v413 = vsub.f32 %v213, %v393
        %v414 = vsub.f32 %v214, %v395
        %v415 = vsub.f32 %v215, %v397
        %v416 = vsub.f32 %v216, %v399
        %v417 = vsub.f32 %v217, %v401
        %v418 = vand.u32 2147483647, %v410
        %v419 = vand.u32 2147483647, %v411
        %v420 = vand.u32 2147483647, %v412
        %v421 = vand.u32 2147483647, %v413
        %v422 = vand.u32 2147483647, %v414
        %v423 = vand.u32 2147483647, %v415
        %v424 = vand.u32 2147483647, %v416
        %v425 = vand.u32 2147483647, %v417
        %426 = vrot.lane.b32.xlu0 %v218, 1
        %v427 = vpop.permute.xlu0 %426
        %428 = vrot.lane.b32.xlu0 %v219, 1
        %v429 = vpop.permute.xlu0 %428
        %430 = vrot.lane.b32.xlu0 %v220, 1
        %v431 = vpop.permute.xlu0 %430
        %432 = vrot.lane.b32.xlu0 %v221, 1
        %v433 = vpop.permute.xlu0 %432
        %434 = vrot.lane.b32.xlu0 %v222, 1
        %v435 = vpop.permute.xlu0 %434
        %436 = vrot.lane.b32.xlu0 %v223, 1
        %v437 = vpop.permute.xlu0 %436
        %438 = vrot.lane.b32.xlu0 %v224, 1
        %v439 = vpop.permute.xlu0 %438
        %440 = vrot.lane.b32.xlu0 %v225, 1
        %v441 = vpop.permute.xlu0 %440
        %v450 = vmul.f32 %v418, %v427
        %v451 = vmul.f32 %v419, %v429
        %v452 = vmul.f32 %v420, %v431
        %v453 = vmul.f32 %v421, %v433
        %v454 = vmul.f32 %v422, %v435
        %v455 = vmul.f32 %v423, %v437
        %v456 = vmul.f32 %v424, %v439
        %v457 = vmul.f32 %v425, %v441
        %466 = vrot.lane.b32.xlu0 %v450, 127
        %v467 = vpop.permute.xlu0 %466
        %468 = vrot.lane.b32.xlu0 %v451, 127
        %v469 = vpop.permute.xlu0 %468
        %470 = vrot.lane.b32.xlu0 %v452, 127
        %v471 = vpop.permute.xlu0 %470
        %472 = vrot.lane.b32.xlu0 %v453, 127
        %v473 = vpop.permute.xlu0 %472
        %474 = vrot.lane.b32.xlu0 %v454, 127
        %v475 = vpop.permute.xlu0 %474
        %476 = vrot.lane.b32.xlu0 %v455, 127
        %v477 = vpop.permute.xlu0 %476
        %478 = vrot.lane.b32.xlu0 %v456, 127
        %v479 = vpop.permute.xlu0 %478
        %480 = vrot.lane.b32.xlu0 %v457, 127
        %v481 = vpop.permute.xlu0 %480
        %vm490 = vcmask 121856
        %v491 = vsel %vm490, %v467, 0.0
        %v492 = vsel %vm490, %v469, 0.0
        %v493 = vadd.f32 %v491, %v492
        %v494 = vsel %vm490, %v471, 0.0
        %v495 = vadd.f32 %v493, %v494
        %v496 = vsel %vm490, %v473, 0.0
        %v497 = vadd.f32 %v495, %v496
        %v498 = vsel %vm490, %v475, 0.0
        %v499 = vadd.f32 %v497, %v498
        %v500 = vsel %vm490, %v477, 0.0
        %v501 = vadd.f32 %v499, %v500
        %v502 = vsel %vm490, %v479, 0.0
        %v503 = vadd.f32 %v501, %v502
        %v504 = vsel %vm490, %v481, 0.0
        %v505 = vadd.f32 %v503, %v504
        %506 = vadd.xlane.f32.xlu0 %v505
        %v507 = vpop.xlane.xlu0 %506
        %v508 = vrot.slane %v507, 4
        %v509 = vadd.f32 %v507, %v508
        %v510 = vrot.slane %v509, 2
        %v511 = vadd.f32 %v509, %v510
        %v512 = vrot.slane %v511, 1
        %v513 = vadd.f32 %v511, %v512
        %s514 = vtos %v513
        %v515 = vsel %vm490, %v218, 0.0
        %v516 = vsel %vm490, %v219, 0.0
        %v517 = vadd.f32 %v515, %v516
        %v518 = vsel %vm490, %v220, 0.0
        %v519 = vadd.f32 %v517, %v518
        %v520 = vsel %vm490, %v221, 0.0
        %v521 = vadd.f32 %v519, %v520
        %v522 = vsel %vm490, %v222, 0.0
        %v523 = vadd.f32 %v521, %v522
        %v524 = vsel %vm490, %v223, 0.0
        %v525 = vadd.f32 %v523, %v524
        %v526 = vsel %vm490, %v224, 0.0
        %v527 = vadd.f32 %v525, %v526
        %v528 = vsel %vm490, %v225, 0.0
        %v529 = vadd.f32 %v527, %v528
        %530 = vadd.xlane.f32.xlu0 %v529
        %v531 = vpop.xlane.xlu0 %530
        %v532 = vrot.slane %v531, 4
        %v533 = vadd.f32 %v531, %v532
        %v534 = vrot.slane %v533, 2
        %v535 = vadd.f32 %v533, %v534
        %v536 = vrot.slane %v535, 1
        %v537 = vadd.f32 %v535, %v536
        %s538 = vtos %v537
        %v539 = vlaneseq
        %v540 = vshrl.u32 %v539, 7
        %v541 = vlaneseq
        %v542 = vand.u32 %v541, 127
        %vm543 = vcmp.eq.s32.totalorder %v540, 0
        %vm544 = vcmp.eq.s32.totalorder %v542, 0
        %vm545 = vmand %vm543, %vm544
        %v546 = vstv %s361
        %v547 = vsel %vm545, %v546, 0.0
        %vm548 = vcmp.eq.s32.totalorder %v542, 1
        %vm549 = vmand %vm543, %vm548
        %v550 = vstv %s385
        %v551 = vsel %vm549, %v550, 0.0
        %v552 = vadd.f32 %v547, %v551
        %vm553 = vcmp.eq.s32.totalorder %v542, 2
        %vm554 = vmand %vm543, %vm553
        %v555 = vstv %s514
        %v556 = vsel %vm554, %v555, 0.0
        %v557 = vadd.f32 %v552, %v556
        %vm558 = vcmp.eq.s32.totalorder %v542, 3
        %vm559 = vmand %vm543, %vm558
        %v560 = vstv %s538
        %v561 = vsel %vm559, %v560, 0.0
        %v562 = vadd.f32 %v557, %v561
        %563 = vst [vmem:[%s207] sm:$0xff] %v562
        %s564 = sand.u32 %s82, 1
        %s565 = scalar_lea.sflag [#allocation4], %s564
        %s566 = sand.u32 %s82, 1
        %s567 = smul.addr %s566, 8
        %s568 = scalar_lea.vmem [#allocation7], %s567
        // Predicated region
        $region37: #{tpu_custom_call.1} parent=27 // pred_check
          %p569 = pneg %p92
        $region38: #{tpu_custom_call.1} parent=27 // pred_check_branch
          %571 = sbr.rel (%p569) target = $region40
        $region39: #{tpu_custom_call.1} parent=27 // pred_region
          %573 = vsyncadd %s565, 0
          %s574 = smul.addr %s22, 8
          %s575 = scalar_lea.hbm %s2, %s574
          %s577 = sshll.u32 %s568, 4
          %s578 = int_to_ptr.vmem [resolvable:$true] %s577
          %s579 = sshll.u32 %s575, 4
          %s580 = int_to_ptr.hbm [resolvable:$true] %s579
          %582 = dma.vmem_to_hbm [thread:$0]  %s578, 128, %s580, %s565
        $region40: #{tpu_custom_call.1} parent=27 // pred_fallthru
          _
      $region28: #{tpu_custom_call.1} parent=5 // pred_fallthru
        _
      %p583 = scmp.le.s32.totalorder 2, %s17
      // Predicated region
      $region41: #{tpu_custom_call.1} parent=5 // pred_check
        %p584 = pneg %p583
      $region42: #{tpu_custom_call.1} parent=5 // pred_check_branch
        %586 = sbr.rel (%p584) target = $region44
      $region43: #{tpu_custom_call.1} parent=5 // pred_region
        %s587 = ssub.s32 %s17, 2
        // Predicated region
        $region45: #{tpu_custom_call.1} parent=43 // pred_check
          %p588 = pneg %p98
        $region46: #{tpu_custom_call.1} parent=43 // pred_check_branch
          %590 = sbr.rel (%p588) target = $region48
        $region47: #{tpu_custom_call.1} parent=43 // pred_region
          %s591 = sand.u32 %s83, 1
          %s592 = scalar_lea.sflag [#allocation4], %s591
          %s593 = sand.u32 %s83, 1
          %s594 = smul.addr %s593, 8
          %s595 = scalar_lea.vmem [#allocation7], %s594
          %597 = dma.done %s592, 128
        $region48: #{tpu_custom_call.1} parent=43 // pred_fallthru
          _
      $region44: #{tpu_custom_call.1} parent=5 // pred_fallthru
        _
    $region6: #{tpu_custom_call.1} parent=1 // loop_footer
      %s21 = sadd.s32 1, %s17
    $region7: #{tpu_custom_call.1} parent=1 // loop_footer_branch
      %16 = sbr.rel target = $region3
    $region8: #{tpu_custom_call.1} parent=1 // loop_exit
      _
    %598 = vsyncpa [#allocation3], 1
    %s599 = scalar_lea.sflag [#allocation3], 1
    %600 = vsyncpa %s599, 1
    %601 = vsyncpa [#allocation6], 1
    %s602 = scalar_lea.sflag [#allocation6], 1
    %603 = vsyncpa %s602, 1
    %604 = vsyncpa [#allocation4], 1
    %s605 = scalar_lea.sflag [#allocation4], 1
    %606 = vsyncpa %s605, 1

</llo_original>
